<compile_context>
chip_gen: v6e
topology: v6e:2x2x1
jax: 0.10.0
libtpu: 0.0.40
codegen_flags: <defaults>
</compile_context>

<pallas_src>
import itertools
from functools import partial

import numpy as np
import jax
import jax.numpy as jnp
from jax import lax
from jax.experimental import pallas as pl
from jax.experimental.pallas import tpu as pltpu

EPS_BN = 1e-4            # scn.BatchNormalization default eps
FILTER = 3               # submanifold conv filter size for p1
N_BATCHES = 8            # the torch code always loops over 8 batches for 3-D data
NEG_INF = -1e30          # finite mask value: avoids inf-inf = NaN in the online softmax
LANE = 128               # TPU lane width; feature dims are padded to multiples of this


def _round_up(x, m):
    return ((x + m - 1) // m) * m


# =============================================================== Pallas kernels
def kv_proj_kernel(enc_ref, wkv_ref, kv_ref):
    """k|v projection: one wide bf16 matmul per encoder tile (fused Wk|Wv weight)."""
    proj = jnp.dot(enc_ref[0], wkv_ref[...], preferred_element_type=jnp.float32)
    kv_ref[0] = proj.astype(kv_ref.dtype)


def attn_kernel(klen_ref, gdec_ref, kv_ref, wp1_ref, wq_ref, wt_ref,
                xp1_ref, xt_ref, q_s, m_s, l_s, acc_s):
    """p1 conv + q projection + per-batch flash attention + trans_conv.

    grid = (batch, q_tile, k_tile).  The innermost ("arbitrary") k_tile axis carries the
    online-softmax state (m/l/acc) in VMEM scratch; batch / q_tile are "parallel" so the
    work shards across v7x's two TensorCores.  Attention is only computed between tiles
    of the same batch (block-diagonal) -- cross-batch tiles are never visited.
    """
    b = pl.program_id(0)
    ki = pl.program_id(2)
    n_k = pl.num_programs(2)
    tq = q_s.shape[0]
    tk = kv_ref.shape[1]
    nf_pad = kv_ref.shape[2] // 2

    @pl.when(ki == 0)
    def _init():
        # p1: 3x3x3 submanifold conv == matmul over the gathered 27-neighborhood.
        xp1 = jnp.dot(gdec_ref[0], wp1_ref[...], preferred_element_type=jnp.float32)
        xp1_ref[0] = xp1                                    # residual branch (f32)
        q_s[...] = jnp.dot(xp1.astype(jnp.bfloat16), wq_ref[...],
                           preferred_element_type=jnp.float32).astype(jnp.bfloat16)
        m_s[...] = jnp.full(m_s.shape, NEG_INF, m_s.dtype)
        l_s[...] = jnp.zeros(l_s.shape, l_s.dtype)
        acc_s[...] = jnp.zeros(acc_s.shape, acc_s.dtype)

    kv = kv_ref[0]                                          # [tk, 2*nf_pad] bf16
    k = kv[:, :nf_pad]
    v = kv[:, nf_pad:]

    # scores: contract on the minor (feature) dim of both operands -- no k.T relayout.
    s = lax.dot_general(q_s[...], k, (((1,), (1,)), ((), ())),
                        preferred_element_type=jnp.float32)          # [tq, tk]
    # mask padded encoder rows of this batch with a large *finite* negative.
    kpos = ki * tk + lax.broadcasted_iota(jnp.int32, (tq, tk), 1)
    s = jnp.where(kpos < klen_ref[b], s, NEG_INF)

    m_prev = m_s[...]
    m_new = jnp.maximum(m_prev, jnp.max(s, axis=-1, keepdims=True))
    alpha = jnp.exp(m_prev - m_new)
    p = jnp.exp(s - m_new)
    l_s[...] = alpha * l_s[...] + jnp.sum(p, axis=-1, keepdims=True)
    acc_s[...] = alpha * acc_s[...] + jnp.dot(p.astype(jnp.bfloat16), v,
                                              preferred_element_type=jnp.float32)
    m_s[...] = m_new

    @pl.when(ki == n_k - 1)
    def _finalize():
        att = acc_s[...] * pl.reciprocal(l_s[...], approx=True)   # softmax denom on EUP
        xt_ref[0] = jnp.dot(att.astype(jnp.bfloat16), wt_ref[...],
                            preferred_element_type=jnp.float32)


def bn_stats_kernel(qlen_ref, xt_ref, stats_ref):
    """Masked global sum / sum-of-squares of x_t over all *valid* decoder points."""
    b = pl.program_id(0)
    qi = pl.program_id(1)
    tq = xt_ref.shape[1]

    @pl.when(jnp.logical_and(b == 0, qi == 0))
    def _init():
        stats_ref[...] = jnp.zeros(stats_ref.shape, stats_ref.dtype)

    x = xt_ref[0]                                                     # [tq, nf_pad] f32
    rpos = qi * tq + lax.broadcasted_iota(jnp.int32, x.shape, 0)
    xv = jnp.where(rpos < qlen_ref[b], x, 0.0)
    upd = jnp.concatenate([jnp.sum(xv, axis=0, keepdims=True),
                           jnp.sum(xv * xv, axis=0, keepdims=True)], axis=0)
    stats_ref[...] = stats_ref[...] + upd


def bn_apply_kernel(xt_ref, xp1_ref, stats_ref, gamma_ref, beta_ref, out_ref, *,
                    n_valid):
    """Training-mode batch-norm (batch statistics) + residual add onto the p1 output."""
    stats = stats_ref[...]
    mean = stats[0:1, :] / n_valid
    var = jnp.maximum(stats[1:2, :] / n_valid - mean * mean, 0.0)
    inv = lax.rsqrt(var + EPS_BN)
    normed = (xt_ref[0] - mean) * inv * gamma_ref[...] + beta_ref[...]
    out_ref[0] = xp1_ref[0] + normed


# ================================================================= host glue
def build_neighbor_index(coords):
    """Rulebook for the 3x3x3 submanifold conv. Missing neighbor -> index N (zero row)."""
    coords = np.asarray(coords)
    lut = {tuple(int(v) for v in c): i for i, c in enumerate(coords)}
    n = coords.shape[0]
    offs = list(itertools.product(range(-1, 2), repeat=3))   # 27 offsets, lexicographic
    idx = np.full((n, len(offs)), n, dtype=np.int32)
    for i in range(n):
        x, y, z, b = (int(v) for v in coords[i])
        for kk, (dx, dy, dz) in enumerate(offs):
            key = (x + dx, y + dy, z + dz, b)
            if key in lut:
                idx[i, kk] = lut[key]
    return idx


def gather_neighborhood(dec_feats, dec_coords):
    # TODO(synk): move this gather into the attention kernel using a scalar-prefetched
    # [Nd, 27] rulebook and a VMEM-resident decoder-feature tile to cut the 27x input DMA.
    nbr = build_neighbor_index(dec_coords)                                     # [Nd, 27]
    pad = jnp.zeros((1, dec_feats.shape[1]), dec_feats.dtype)
    feats_pad = jnp.concatenate([dec_feats, pad], axis=0)
    return feats_pad[nbr].reshape(dec_feats.shape[0], -1)                      # [Nd, 27*Cin]


def _batch_layout(batch_ids, n_batches):
    """Per-batch counts + within-batch position (inputs are batch-contiguous, like scn)."""
    batch_ids = np.asarray(batch_ids, np.int64)
    assert np.all(np.diff(batch_ids) >= 0), "points must be batch-contiguous"
    counts = np.bincount(batch_ids, minlength=n_batches).astype(np.int64)
    starts = np.concatenate([[0], np.cumsum(counts)[:-1]])
    within = np.arange(len(batch_ids)) - starts[batch_ids]
    return counts, within


def cross_transformer_layer(dec_feats, dec_coords, enc_feats, enc_coords, params):
    dec_coords = np.asarray(dec_coords)
    enc_coords = np.asarray(enc_coords)
    n_dec, _ = dec_feats.shape
    n_enc, c_enc = enc_feats.shape
    nf = params["wq"].shape[0]
    nf_pad = _round_up(nf, LANE)

    # ---- host glue: 3x3x3 rulebook + neighborhood gather --------------------------------
    gathered = gather_neighborhood(dec_feats, dec_coords)               # [Nd, 27*Cdec]
    ck = _round_up(gathered.shape[1], LANE)
    gathered = jnp.pad(gathered, ((0, 0), (0, ck - gathered.shape[1])))

    # ---- per-batch padded layout (block-diagonal attention, batch starts tile-aligned) --
    dbatch = dec_coords[:, 3]
    ebatch = enc_coords[:, 3]
    qcnt, qwithin = _batch_layout(dbatch, N_BATCHES)
    kcnt, kwithin = _batch_layout(ebatch, N_BATCHES)
    tq = min(256, _round_up(max(int(qcnt.max()), 1), 16))
    tk = min(512, _round_up(max(int(kcnt.max()), 1), 16))
    qp = _round_up(max(int(qcnt.max()), 1), tq)
    kp = _round_up(max(int(kcnt.max()), 1), tk)
    nqt, nkt = qp // tq, kp // tk

    drows = jnp.asarray(dbatch * qp + qwithin, jnp.int32)
    erows = jnp.asarray(ebatch * kp + kwithin, jnp.int32)

    gdec_p = (jnp.zeros((N_BATCHES * qp, ck), jnp.bfloat16)
              .at[drows].set(gathered.astype(jnp.bfloat16))
              .reshape(N_BATCHES, qp, ck))
    enc_p = (jnp.zeros((N_BATCHES * kp, c_enc), jnp.bfloat16)
             .at[erows].set(enc_feats.astype(jnp.bfloat16))
             .reshape(N_BATCHES, kp, c_enc))

    qlen = jnp.asarray(qcnt, jnp.int32)
    klen = jnp.asarray(kcnt, jnp.int32)

    # ---- weights: pad nf -> nf_pad (lane dense), fuse Wk|Wv, bf16 for the MXU ------------
    def pad2(w, r, c):
        return jnp.pad(w, ((0, r - w.shape[0]), (0, c - w.shape[1])))

    wp1 = pad2(params["wp1"].reshape(-1, nf), ck, nf_pad).astype(jnp.bfloat16)
    wq = pad2(params["wq"], nf_pad, nf_pad).astype(jnp.bfloat16)
    wkv = jnp.concatenate([pad2(params["wk"], c_enc, nf_pad),
                           pad2(params["wv"], c_enc, nf_pad)], axis=1).astype(jnp.bfloat16)
    wt = pad2(params["wt"], nf_pad, nf_pad).astype(jnp.bfloat16)
    gamma = jnp.pad(params["gamma"], (0, nf_pad - nf)).reshape(1, nf_pad).astype(jnp.float32)
    beta = jnp.pad(params["beta"], (0, nf_pad - nf)).reshape(1, nf_pad).astype(jnp.float32)

    # ---- kernel 1: fused k|v projection --------------------------------------------------
    kv = pl.pallas_call(
        kv_proj_kernel,
        out_shape=jax.ShapeDtypeStruct((N_BATCHES, kp, 2 * nf_pad), jnp.bfloat16),
        grid=(N_BATCHES, nkt),
        in_specs=[pl.BlockSpec((1, tk, c_enc), lambda b, k: (b, k, 0)),
                  pl.BlockSpec((c_enc, 2 * nf_pad), lambda b, k: (0, 0))],
        out_specs=pl.BlockSpec((1, tk, 2 * nf_pad), lambda b, k: (b, k, 0)),
        compiler_params=pltpu.CompilerParams(
            dimension_semantics=("parallel", "parallel")),
    )(enc_p, wkv)

    # ---- kernel 2: p1 conv + q proj + block-diagonal flash attention + trans_conv --------
    xp1_p, xt_p = pl.pallas_call(
        attn_kernel,
        out_shape=(jax.ShapeDtypeStruct((N_BATCHES, qp, nf_pad), jnp.float32),
                   jax.ShapeDtypeStruct((N_BATCHES, qp, nf_pad), jnp.float32)),
        grid_spec=pltpu.PrefetchScalarGridSpec(
            num_scalar_prefetch=1,
            grid=(N_BATCHES, nqt, nkt),
            in_specs=[
                pl.BlockSpec((1, tq, ck), lambda b, qi, ki, kl: (b, qi, 0)),
                pl.BlockSpec((1, tk, 2 * nf_pad), lambda b, qi, ki, kl: (b, ki, 0)),
                pl.BlockSpec((ck, nf_pad), lambda b, qi, ki, kl: (0, 0)),
                pl.BlockSpec((nf_pad, nf_pad), lambda b, qi, ki, kl: (0, 0)),
                pl.BlockSpec((nf_pad, nf_pad), lambda b, qi, ki, kl: (0, 0)),
            ],
            out_specs=[
                pl.BlockSpec((1, tq, nf_pad), lambda b, qi, ki, kl: (b, qi, 0)),
                pl.BlockSpec((1, tq, nf_pad), lambda b, qi, ki, kl: (b, qi, 0)),
            ],
            scratch_shapes=[pltpu.VMEM((tq, nf_pad), jnp.bfloat16),   # q
                            pltpu.VMEM((tq, 1), jnp.float32),         # m
                            pltpu.VMEM((tq, 1), jnp.float32),         # l
                            pltpu.VMEM((tq, nf_pad), jnp.float32)]),  # acc
        compiler_params=pltpu.CompilerParams(
            dimension_semantics=("parallel", "parallel", "arbitrary")),
    )(klen, gdec_p, kv, wp1, wq, wt)

    # ---- kernel 3: masked global BN statistics (sum, sum of squares) ---------------------
    stats = pl.pallas_call(
        bn_stats_kernel,
        out_shape=jax.ShapeDtypeStruct((2, nf_pad), jnp.float32),
        grid_spec=pltpu.PrefetchScalarGridSpec(
            num_scalar_prefetch=1,
            grid=(N_BATCHES, nqt),
            in_specs=[pl.BlockSpec((1, tq, nf_pad), lambda b, qi, ql: (b, qi, 0))],
            out_specs=pl.BlockSpec((2, nf_pad), lambda b, qi, ql: (0, 0))),
        compiler_params=pltpu.CompilerParams(
            dimension_semantics=("arbitrary", "arbitrary")),
    )(qlen, xt_p)

    # ---- kernel 4: batch-norm apply + residual add (lane-dense output) -------------------
    out_p = pl.pallas_call(
        partial(bn_apply_kernel, n_valid=float(n_dec)),
        out_shape=jax.ShapeDtypeStruct((N_BATCHES, qp, nf_pad), jnp.float32),
        grid=(N_BATCHES, nqt),
        in_specs=[pl.BlockSpec((1, tq, nf_pad), lambda b, qi: (b, qi, 0)),
                  pl.BlockSpec((1, tq, nf_pad), lambda b, qi: (b, qi, 0)),
                  pl.BlockSpec((2, nf_pad), lambda b, qi: (0, 0)),
                  pl.BlockSpec((1, nf_pad), lambda b, qi: (0, 0)),
                  pl.BlockSpec((1, nf_pad), lambda b, qi: (0, 0))],
        out_specs=pl.BlockSpec((1, tq, nf_pad), lambda b, qi: (b, qi, 0)),
        compiler_params=pltpu.CompilerParams(
            dimension_semantics=("parallel", "parallel")),
    )(xt_p, xp1_p, stats, gamma, beta)

    # ---- unpad: back to original point order and true nf width ---------------------------
    out = out_p.reshape(N_BATCHES * qp, nf_pad)[drows]
    return out[:, :nf]


# ----------------------------------------------------------------- pure-JAX reference
def reference(dec_feats, dec_coords, enc_feats, enc_coords, params):
    nf = params["wq"].shape[0]
    gathered = gather_neighborhood(dec_feats, dec_coords)
    x_p1 = gathered @ params["wp1"].reshape(-1, nf)
    q = x_p1 @ params["wq"]
    k = enc_feats @ params["wk"]
    v = enc_feats @ params["wv"]
    dc = np.asarray(dec_coords)[:, 3]
    ec = np.asarray(enc_coords)[:, 3]
    feats, qs, ks = [], 0, 0
    for b in range(N_BATCHES):                      # mirrors the torch per-batch loop
        nq = int((dc == b).sum())
        nk = int((ec == b).sum())
        dq, dk, dv = q[qs:qs + nq], k[ks:ks + nk].T, v[ks:ks + nk]
        feats.append(jax.nn.softmax(dq @ dk, axis=-1) @ dv)
        qs += nq
        ks += nk
    x_r = jnp.concatenate(feats, axis=0)
    x_t = x_r @ params["wt"]
    mean = x_t.mean(0, keepdims=True)
    var = ((x_t - mean) ** 2).mean(0, keepdims=True)
    normed = (x_t - mean) / jnp.sqrt(var + EPS_BN) * params["gamma"] + params["beta"]
    return x_p1 + normed


# -------------------------------------------------------------------------------- main
def make_coords(key, n_batches, size):
    """Per batch: a 2x2x2 cube of 8 points (unique coords, so p1 sees real neighbors)."""
    corners = np.array(list(itertools.product((0, 1), repeat=3)), dtype=np.int32)
    keys = jax.random.split(key, n_batches)
    out = []
    for b in range(n_batches):
        base = np.asarray(jax.random.randint(keys[b], (3,), 1, size - 2), dtype=np.int32)
        c = base[None, :] + corners
        out.append(np.concatenate([c, np.full((8, 1), b, np.int32)], axis=1))
    return np.concatenate(out, axis=0)                                        # [8*nb, 4]


if __name__ == "__main__":
    decoder_nf_in, encoder_nf_in, nf, max_data_size = 4, 6, 32, 16
    key = jax.random.PRNGKey(0)
    k_dc, k_ec, k_df, k_ef, k_w = jax.random.split(key, 5)

    dec_coords = make_coords(k_dc, N_BATCHES, max_data_size)                  # [64, 4]
    enc_coords = make_coords(k_ec, N_BATCHES, max_data_size)                  # [64, 4]
    n_dec, n_enc = dec_coords.shape[0], enc_coords.shape[0]

    dec_feats = jax.random.normal(k_df, (n_dec, decoder_nf_in), jnp.float32)
    enc_feats = jax.random.normal(k_ef, (n_enc, encoder_nf_in), jnp.float32)

    kw = jax.random.split(k_w, 5)
    params = {
        "wp1": 0.1 * jax.random.normal(kw[0], (FILTER ** 3, decoder_nf_in, nf), jnp.float32),
        "wq": 0.1 * jax.random.normal(kw[1], (nf, nf), jnp.float32),
        "wk": 0.1 * jax.random.normal(kw[2], (encoder_nf_in, nf), jnp.float32),
        "wv": 0.1 * jax.random.normal(kw[3], (encoder_nf_in, nf), jnp.float32),
        "wt": 0.1 * jax.random.normal(kw[4], (nf, nf), jnp.float32),
        "gamma": jnp.ones((nf,), jnp.float32),        # scn.BatchNormalization init
        "beta": jnp.zeros((nf,), jnp.float32),
    }

    out = cross_transformer_layer(dec_feats, dec_coords, enc_feats, enc_coords, params)
    out = jax.block_until_ready(out)

    ref = reference(dec_feats, dec_coords, enc_feats, enc_coords, params)
    # bf16 MXU operands (f32 accumulation) vs the all-f32 reference -> looser tolerance.
    np.testing.assert_allclose(np.asarray(out), np.asarray(ref), rtol=5e-2, atol=5e-2)

    # TODO(synk): scn BatchNormalization running-statistics (momentum buffer) update is
    # training-state bookkeeping and is not reproduced.
    print("KERNEL_OK")
</pallas_src>

<mosaic_0001>
module attributes {stable_mosaic.version = 11 : i64} {
  func.func @kv_proj_kernel(%arg0: i32, %arg1: i32, %arg2: memref<1x16x6xbf16, #tpu.memory_space<vmem>>, %arg3: memref<6x256xbf16, #tpu.memory_space<vmem>>, %arg4: memref<1x16x256xbf16, #tpu.memory_space<vmem>>) attributes {dimension_semantics = [#tpu.dimension_semantics<parallel>, #tpu.dimension_semantics<parallel>], iteration_bounds = array<i64: 8, 1>, scalar_prefetch = 0 : i64, scratch_operands = 0 : i64, tpu.core_type = #tpu.core_type<tc>, window_params = [{transform_indices = @transform_0, window_bounds = array<i64: 1, 16, 6>}, {pipeline_mode = #tpu.pipeline_mode<synchronous>, transform_indices = @transform_1, window_bounds = array<i64: 6, 256>}, {transform_indices = @transform_2, window_bounds = array<i64: 1, 16, 256>}]} {
    %c0 = arith.constant 0 : index
    %c0_0 = arith.constant 0 : index
    %c0_1 = arith.constant 0 : index
    %0 = vector.load %arg2[%c0, %c0_0, %c0_1] : memref<1x16x6xbf16, #tpu.memory_space<vmem>>, vector<1x16x6xbf16>
    %1 = vector.shape_cast %0 : vector<1x16x6xbf16> to vector<16x6xbf16>
    %c0_2 = arith.constant 0 : index
    %c0_3 = arith.constant 0 : index
    %2 = vector.load %arg3[%c0_2, %c0_3] : memref<6x256xbf16, #tpu.memory_space<vmem>>, vector<6x256xbf16>
    %cst = arith.constant dense<0.000000e+00> : vector<16x256xf32>
    %3 = tpu.matmul %1, %2, %cst {dimension_numbers = #tpu.dot_dimension_numbers<[1], [0], [0], [1], [0, 0, 1, 1], [], []>} : vector<16x6xbf16>, vector<6x256xbf16>, vector<16x256xf32> -> vector<16x256xf32>
    %4 = arith.truncf %3 : vector<16x256xf32> to vector<16x256xbf16>
    %c0_4 = arith.constant 0 : index
    %c0_5 = arith.constant 0 : index
    %c0_6 = arith.constant 0 : index
    %5 = vector.load %arg4[%c0_4, %c0_5, %c0_6] : memref<1x16x256xbf16, #tpu.memory_space<vmem>>, vector<1x16x256xbf16>
    %6 = vector.shape_cast %5 : vector<1x16x256xbf16> to vector<16x256xbf16>
    %7 = vector.shape_cast %4 : vector<16x256xbf16> to vector<1x16x256xbf16>
    tpu.vector_store %arg4[%c0_4, %c0_5, %c0_6], %7 {strides = array<i32>} : memref<1x16x256xbf16, #tpu.memory_space<vmem>>, vector<1x16x256xbf16>,
    return
  }
  func.func @transform_0(%arg0: i32, %arg1: i32) -> (i32, i32, i32) {
    %c0_i32 = arith.constant 0 : i32
    %c0_i32_0 = arith.constant 0 : i32
    return %arg0, %arg1, %c0_i32 : i32, i32, i32
  }
  func.func @transform_1(%arg0: i32, %arg1: i32) -> (i32, i32) {
    %c0_i32 = arith.constant 0 : i32
    %c0_i32_0 = arith.constant 0 : i32
    %c0_i32_1 = arith.constant 0 : i32
    return %c0_i32, %c0_i32_0 : i32, i32
  }
  func.func @transform_2(%arg0: i32, %arg1: i32) -> (i32, i32, i32) {
    %c0_i32 = arith.constant 0 : i32
    %c0_i32_0 = arith.constant 0 : i32
    return %arg0, %arg1, %c0_i32 : i32, i32, i32
  }
}

</mosaic_0001>

<llo_original>
// kernel: tpu_custom_call.1
$region0: #{tpu_custom_call.1}
  #allocation0 [shape = 'u32[]', space=smem, size = 0x4, offset = 0x4, fixed_abs, tag = 'smem constant byte address 0x4 - core index']
  #allocation1 [shape = 'u32[144,128]{1,0:T(1,128)}', space=vmem, size = 0x12000, scoped, tag = 'internal scratch']
  %s0 = inlined_call_operand.vmem [shape: bf16[8,16,6], index: 0, kind: input, shape index: {}]
  %s1 = inlined_call_operand.vmem [shape: bf16[6,256], index: 1, kind: input, shape index: {}]
  %s2 = inlined_call_operand.hbm [shape: bf16[8,16,256], index: 2, kind: output, shape index: {}]
  %s3 = sld [smem:[#allocation0]]
  $region41: #{tpu_custom_call.1} parent=0
    _
  %s5 = ssub.s32 1, %s3
  %s6 = scalar_select 0, %s5, %s3
  $region1: #{tpu_custom_call.1} parent=0
    #allocation2 [shape = 'u8[16384]{0}', space=vmem, size = 0x4000, scoped, tag = 'output window, operand 0']
    #allocation3 [shape = 's32[2]{0}', space=sflag, size = 0x8, scoped, tag = 'scoped memory for tpu_custom_call.1']
    %7 = vsyncpa [#allocation3], 0
    %s8 = scalar_lea.sflag [#allocation3], 1
    %9 = vsyncpa %s8, 0
    loop: start=0, step=1, limit=10
    $region2: #{tpu_custom_call.1} parent=1 // loop_pre_header
      _
    $region3: #{tpu_custom_call.1} parent=1 // loop_header
      %s11 = sphi 0, %s15
      %p12 = scmp.ge.s32.totalorder %s11, 10
      %s18 = sphi 0, %s30
      %s19 = sphi 0, %s26
      %s20 = sphi 0, %s18
      %s21 = sphi 0, %s19
      %s22 = sphi 0, %s20
      %s23 = sphi 0, %s21
      %s35 = sphi 0, %s37
      %s38 = sphi 0, %s35
      %s39 = sphi 0, %s38
      %s55 = sphi 0, %s39
      %s59 = sphi 0, %s59
      %s61 = sphi 0, %s59
      %s62 = sphi 0, %s61
      %s76 = sphi 0, %s62
      %s84 = sphi 0, %s86
      %s87 = sphi 0, %s84
      %s88 = sphi 0, %s87
      %s104 = sphi 0, %s88
    $region4: #{tpu_custom_call.1} parent=1 // loop_header_branch
      %14 = sbr.rel (%p12) target = $region8
    $region5: #{tpu_custom_call.1} parent=1 // loop_body
      %s16 = ssub.s32 %s11, 1
      %s17 = ssub.s32 %s11, 2
      %s24 = sadd.s32 1, %s19
      %p25 = scmp.ge.s32.totalorder %s24, 1
      %s26 = scalar_select %p25, 0, %s24
      %s27 = sadd.s32 1, %s18
      %s28 = scalar_select %p25, %s27, %s18
      %p29 = scmp.ge.s32.totalorder %s28, 8
      %s30 = scalar_select %p29, 0, %s28
      %s31 = ssub.s32 %s18, %s30
      %s32 = ssub.s32 %s19, %s26
      %s33 = sor.u32 %s31, %s32
      %p34 = scmp.eq.s32.totalorder %s33, 0
      %s36 = sadd.s32 %s35, 1
      %s37 = scalar_select %p34, %s35, %s36
      %p40 = pneg %p34
      %p41 = scmp.eq.s32.totalorder %s11, 7
      %p42 = por %p40, %p41
      %p43 = scmp.ne.s32.totalorder %s35, %s38
      %p44 = scmp.eq.s32.totalorder %s11, 0
      %p45 = por %p43, %p44
      %p46 = scmp.ne.s32.totalorder %s35, %s38
      %p47 = scmp.eq.s32.totalorder %s16, 7
      %p48 = por %p46, %p47
      %p49 = scmp.ne.s32.totalorder %s38, %s39
      %p50 = scmp.eq.s32.totalorder %s16, 0
      %p51 = por %p49, %p50
      %p52 = scmp.ne.s32.totalorder %s38, %s39
      %p53 = scmp.eq.s32.totalorder %s17, 7
      %p54 = por %p52, %p53
      %p56 = scmp.ne.s32.totalorder %s39, %s55
      %p57 = scmp.eq.s32.totalorder %s17, 0
      %p58 = por %p56, %p57
      %s60 = sadd.s32 %s59, 1
      %p63 = scmp.eq.s32.totalorder %s11, 7
      %p64 = scmp.ne.s32.totalorder %s59, %s61
      %p65 = scmp.eq.s32.totalorder %s11, 0
      %p66 = por %p64, %p65
      %p67 = scmp.ne.s32.totalorder %s59, %s61
      %p68 = scmp.eq.s32.totalorder %s16, 7
      %p69 = por %p67, %p68
      %p70 = scmp.ne.s32.totalorder %s61, %s62
      %p71 = scmp.eq.s32.totalorder %s16, 0
      %p72 = por %p70, %p71
      %p73 = scmp.ne.s32.totalorder %s61, %s62
      %p74 = scmp.eq.s32.totalorder %s17, 7
      %p75 = por %p73, %p74
      %p77 = scmp.ne.s32.totalorder %s62, %s76
      %p78 = scmp.eq.s32.totalorder %s17, 0
      %p79 = por %p77, %p78
      %s80 = ssub.s32 %s18, %s30
      %s81 = ssub.s32 %s19, %s26
      %s82 = sor.u32 %s80, %s81
      %p83 = scmp.eq.s32.totalorder %s82, 0
      %s85 = sadd.s32 %s84, 1
      %s86 = scalar_select %p83, %s84, %s85
      %p89 = pneg %p83
      %p90 = scmp.eq.s32.totalorder %s11, 7
      %p91 = por %p89, %p90
      %p92 = scmp.ne.s32.totalorder %s84, %s87
      %p93 = scmp.eq.s32.totalorder %s11, 0
      %p94 = por %p92, %p93
      %p95 = scmp.ne.s32.totalorder %s84, %s87
      %p96 = scmp.eq.s32.totalorder %s16, 7
      %p97 = por %p95, %p96
      %p98 = scmp.ne.s32.totalorder %s87, %s88
      %p99 = scmp.eq.s32.totalorder %s16, 0
      %p100 = por %p98, %p99
      %p101 = scmp.ne.s32.totalorder %s87, %s88
      %p102 = scmp.eq.s32.totalorder %s17, 7
      %p103 = por %p101, %p102
      %p105 = scmp.ne.s32.totalorder %s88, %s104
      %p106 = scmp.eq.s32.totalorder %s17, 0
      %p107 = por %p105, %p106
      %p108 = scmp.le.s32.totalorder 1, %s11
      %p109 = scmp.lt.s32.totalorder %s11, 9
      %p110 = pnand %p108, %p109
      %p111 = pneg %p110
      // Predicated region
      $region9: #{tpu_custom_call.1} parent=5 // pred_check
        _
      $region10: #{tpu_custom_call.1} parent=5 // pred_check_branch
        %113 = sbr.rel (%p110) target = $region12
      $region11: #{tpu_custom_call.1} parent=5 // pred_region
        %s114 = ssub.s32 %s11, 1
        // Predicated region
        $region13: #{tpu_custom_call.1} parent=11 // pred_check
          %p115 = pneg %p72
        $region14: #{tpu_custom_call.1} parent=11 // pred_check_branch
          %117 = sbr.rel (%p115) target = $region16
        $region15: #{tpu_custom_call.1} parent=11 // pred_region
          _
        $region16: #{tpu_custom_call.1} parent=11 // pred_fallthru
          _
      $region12: #{tpu_custom_call.1} parent=5 // pred_fallthru
        _
      %p118 = scmp.lt.s32.totalorder %s11, 8
      // Predicated region
      $region17: #{tpu_custom_call.1} parent=5 // pred_check
        %p119 = pneg %p118
      $region18: #{tpu_custom_call.1} parent=5 // pred_check_branch
        %121 = sbr.rel (%p119) target = $region20
      $region19: #{tpu_custom_call.1} parent=5 // pred_region
        // Predicated region
        $region21: #{tpu_custom_call.1} parent=19 // pred_check
          %p122 = pneg %p45
        $region22: #{tpu_custom_call.1} parent=19 // pred_check_branch
          %124 = sbr.rel (%p122) target = $region24
        $region23: #{tpu_custom_call.1} parent=19 // pred_region
          %s125 = smul.u32 2, %s19
          %p126 = scmp.lt.s32.totalorder %s18, 7
          %s127 = scalar_select %p126, %s18, 7
          %p128 = scmp.lt.s32.totalorder %s125, 1
          %s129 = scalar_select %p128, %s125, 1
          %s130 = smul.addr %s127, 2
          %s131 = sadd.s32 %s129, %s130
          %s132 = smul.addr %s131, 4
          %s133 = scalar_lea.vmem %s0, %s132
          %s134 = smul.u32 2, %s19
        $region24: #{tpu_custom_call.1} parent=19 // pred_fallthru
          _
      $region20: #{tpu_custom_call.1} parent=5 // pred_fallthru
        _
      %p135 = scmp.le.s32.totalorder 1, %s11
      %p136 = scmp.lt.s32.totalorder %s11, 9
      %p137 = pnand %p135, %p136
      %p138 = pneg %p137
      // Predicated region
      $region25: #{tpu_custom_call.1} parent=5 // pred_check
        _
      $region26: #{tpu_custom_call.1} parent=5 // pred_check_branch
        %140 = sbr.rel (%p137) target = $region28
      $region27: #{tpu_custom_call.1} parent=5 // pred_region
        %s141 = ssub.s32 %s11, 1
        %s142 = smul.u32 2, %s21
        %p143 = scmp.lt.s32.totalorder %s20, 7
        %s144 = scalar_select %p143, %s20, 7
        %p145 = scmp.lt.s32.totalorder %s142, 1
        %s146 = scalar_select %p145, %s142, 1
        %s147 = smul.addr %s144, 2
        %s148 = sadd.s32 %s146, %s147
        %s149 = smul.addr %s148, 4
        %s150 = scalar_lea.vmem %s0, %s149
        %p151 = pneg %p51
        %p152 = pneg %p48
        %p153 = pneg %p72
        %p154 = pneg %p69
        %p155 = pneg %p100
        %p156 = pneg %p97
        %s157 = sand.u32 %s87, 1
        %s158 = scalar_lea.sflag [#allocation3], %s157
        %s159 = sand.u32 %s87, 1
        %s160 = smul.addr %s159, 16
        %s161 = scalar_lea.vmem [#allocation2], %s160
        %s162 = smul.u32 2, %s21
        %p163 = scmp.lt.s32.totalorder %s20, 7
        %s164 = scalar_select %p163, %s20, 7
        %p165 = scmp.lt.s32.totalorder %s162, 1
        %s166 = scalar_select %p165, %s162, 1
        %s167 = smul.addr %s164, 2
        %s168 = sadd.s32 %s166, %s167
        %s169 = smul.addr %s168, 4
        %s170 = scalar_lea.vmem %s0, %s169
        %s171 = smul.u32 2, %s21
        %s172 = smul.u32 2, %s21
        %v174 = vld [vmem:[%s170] sm:$0xf]
        %v175 = vld [vmem:[%s170 + $0x4] sm:$0xf]
        %v176 = vld [vmem:[%s1] sm:$0x77]
        %v179 = vunpack.c.l.b16 %v174
        %v180 = vunpack.c.l.b16 %v175
        %v181 = vpack.c.b16 %v180, %v179
        %v183 = vunpack.c.l.b16 %v176
        %v184 = vunpack.c.h.b16 %v176
        %v185 = vpack.c.b16 %v183, %v183
        %v186 = vpack.c.b16 %v184, %v184
        %vm187 = vcmask 48128
        %v189 = vsel %vm187, %v181, 0
        %vm191 = vcmask 1042432
        %v193 = vsel %vm191, %v185, 0
        %v196 = vsel %vm191, %v186, 0
        %198 = vmatprep.subr.bf16.mxu0 0
        %199 = vmatpush1.bf16.msra.mxu0 0
        %200 = vmatprep.subr.bf16.mxu0 0
        %201 = vmatpush1.bf16.msra.mxu0 0
        %202 = vmatprep.subr.bf16.mxu0 0
        %203 = vmatpush1.bf16.msra.mxu0 0
        %204 = vmatprep.subr.bf16.mxu0 0
        %205 = vmatpush1.bf16.msra.mxu0 0
        %206 = vmatprep.subr.bf16.mxu0 0
        %207 = vmatpush1.bf16.msra.mxu0 0
        %208 = vmatprep.subr.bf16.mxu0 0
        %209 = vmatpush1.bf16.msra.mxu0 0
        %210 = vmatprep.subr.bf16.mxu0 0
        %211 = vmatpush1.bf16.msra.mxu0 0
        %212 = vmatprep.subr.bf16.mxu0 %v196
        %213 = vmatpush1.bf16.msra.mxu0 %v193
        %214 = vmatprep.subr.bf16.mxu0 0
        %215 = vmatpush2.bf16.msra.mxu0 0
        %216 = vmatprep.subr.bf16.mxu0 0
        %217 = vmatpush2.bf16.msra.mxu0 0
        %218 = vmatprep.subr.bf16.mxu0 0
        %219 = vmatpush2.bf16.msra.mxu0 0
        %220 = vmatprep.subr.bf16.mxu0 0
        %221 = vmatpush2.bf16.msra.mxu0 0
        %222 = vmatprep.subr.bf16.mxu0 0
        %223 = vmatpush2.bf16.msra.mxu0 0
        %224 = vmatprep.subr.bf16.mxu0 0
        %225 = vmatpush2.bf16.msra.mxu0 0
        %226 = vmatprep.subr.bf16.mxu0 0
        %227 = vmatpush2.bf16.msra.mxu0 0
        %228 = vmatprep.subr.bf16.mxu0 0
        %229 = vmatpush2.bf16.msra.mxu0 0
        %230 = vmatprep.mubr.bf16.mxu0 0
        %231 = vmatmul.mubr.bf16.gmra.mxu0 %v189
        %v232 = vpop.f32.mrf.mxu0
        %v233 = vadd.f32 0.0, %v232
        %v234 = vpop.f32.mrf.mxu0
        %v235 = vadd.f32 0.0, %v234
        %v236 = vpop.f32.mrf.mxu0
        %v237 = vadd.f32 0.0, %v236
        %v238 = vpop.f32.mrf.mxu0
        %v239 = vadd.f32 0.0, %v238
        %240 = vdwg.mxu0
        %v241 = vpack.c.bf16 %v237, %v233
        %v242 = vpack.c.bf16 %v239, %v235
        %v245 = vunpack.c.l.b16 %v241
        %v246 = vunpack.c.l.b16 %v242
        %v247 = vunpack.c.h.b16 %v241
        %v248 = vunpack.c.h.b16 %v242
        %v249 = vpack.c.b16 %v246, %v245
        %v250 = vpack.c.b16 %v248, %v247
        %253 = vst [vmem:[%s161] sm:$0xff] %v249
        %254 = vst [vmem:[%s161 + $0x8] sm:$0xff] %v250
        %s255 = sand.u32 %s87, 1
        %s256 = scalar_lea.sflag [#allocation3], %s255
        %s257 = sand.u32 %s87, 1
        %s258 = smul.addr %s257, 16
        %s259 = scalar_lea.vmem [#allocation2], %s258
        // Predicated region
        $region29: #{tpu_custom_call.1} parent=27 // pred_check
          %p260 = pneg %p97
        $region30: #{tpu_custom_call.1} parent=27 // pred_check_branch
          %262 = sbr.rel (%p260) target = $region32
        $region31: #{tpu_custom_call.1} parent=27 // pred_region
          %s263 = smul.u32 2, %s21
          %s265 = ssub.s32 256, 256
          %266 = vsyncadd %s256, %s265
          %s267 = smul.addr %s263, 2
          %s268 = smul.addr %s20, 4
          %s269 = sadd.s32 %s267, %s268
          %s270 = smul.addr %s269, 64
          %s271 = scalar_lea.hbm %s2, %s270
          %s272 = sshll.u32 %s259, 4
          %s273 = int_to_ptr.vmem [resolvable:$true] %s272
          %278 = dma.vmem_to_hbm [thread:$0]  %s273, 256, %s271, %s256, 128, 128, 8
        $region32: #{tpu_custom_call.1} parent=27 // pred_fallthru
          _
      $region28: #{tpu_custom_call.1} parent=5 // pred_fallthru
        _
      %p279 = scmp.le.s32.totalorder 2, %s11
      // Predicated region
      $region33: #{tpu_custom_call.1} parent=5 // pred_check
        %p280 = pneg %p279
      $region34: #{tpu_custom_call.1} parent=5 // pred_check_branch
        %282 = sbr.rel (%p280) target = $region36
      $region35: #{tpu_custom_call.1} parent=5 // pred_region
        %s283 = ssub.s32 %s11, 2
        // Predicated region
        $region37: #{tpu_custom_call.1} parent=35 // pred_check
          %p284 = pneg %p103
        $region38: #{tpu_custom_call.1} parent=35 // pred_check_branch
          %286 = sbr.rel (%p284) target = $region40
        $region39: #{tpu_custom_call.1} parent=35 // pred_region
          %s287 = sand.u32 %s88, 1
          %s288 = scalar_lea.sflag [#allocation3], %s287
          %s289 = sand.u32 %s88, 1
          %s290 = smul.addr %s289, 16
          %s291 = scalar_lea.vmem [#allocation2], %s290
          %292 = dma.done %s288, 256
        $region40: #{tpu_custom_call.1} parent=35 // pred_fallthru
          _
      $region36: #{tpu_custom_call.1} parent=5 // pred_fallthru
        _
    $region6: #{tpu_custom_call.1} parent=1 // loop_footer
      %s15 = sadd.s32 1, %s11
    $region7: #{tpu_custom_call.1} parent=1 // loop_footer_branch
      %10 = sbr.rel target = $region3
    $region8: #{tpu_custom_call.1} parent=1 // loop_exit
      _
    %293 = vsyncpa [#allocation3], 1
    %s294 = scalar_lea.sflag [#allocation3], 1
    %295 = vsyncpa %s294, 1

</llo_original>
